<compile_context>
chip_gen: v7x
topology: tpu7x:2x2x1
jax: 0.10.0
libtpu: 0.0.40
codegen_flags: <defaults>
</compile_context>

<pallas_src>
import math

import jax
import jax.numpy as jnp
from jax import lax
from jax.experimental import pallas as pl
from jax.experimental.pallas import tpu as pltpu


def feat_avg_pool_forward(x, weight, bias, *, mxu_dtype=None):
    """FeatAvgPool.forward (conv1d k=1 + ReLU) as a single Pallas kernel.

    x:      (B, T, Cin)  — same layout the torch module receives
    weight: (H, Cin)     — Conv1d weight with the trailing k=1 dim squeezed
    bias:   (H,)
    returns (B, H, T)    — identical layout to the torch forward output
    """
    B, T, Cin = x.shape
    H = weight.shape[0]
    bias2d = bias.reshape(H, 1)

    def kernel(x_ref, w_ref, b_ref, out_ref):
        xb = x_ref[...]            # (T, Cin)
        wb = w_ref[...]            # (H, Cin)
        if mxu_dtype is not None:  # bf16 into the MXU; accumulate in f32
            xb = xb.astype(mxu_dtype)
            wb = wb.astype(mxu_dtype)
        # y[h, t] = sum_c w[h, c] * x[t, c]  — the channel contraction IS the
        # Conv1d(k=1) applied to x.transpose(1, 2); no transpose materialized.
        y = lax.dot_general(
            wb, xb,
            dimension_numbers=(((1,), (1,)), ((), ())),
            preferred_element_type=jnp.float32,
        )                           # (H, T), f32
        y = y + b_ref[...]          # bias (H, 1) broadcasts over the T lanes
        out_ref[...] = jnp.maximum(y, 0.0).astype(out_ref.dtype)

    return pl.pallas_call(
        kernel,
        out_shape=jax.ShapeDtypeStruct((B, H, T), jnp.float32),
        grid=(B,),
        in_specs=[
            pl.BlockSpec((None, T, Cin), lambda b: (b, 0, 0)),  # per-batch slab
            pl.BlockSpec((H, Cin), lambda b: (0, 0)),           # weight (resident)
            pl.BlockSpec((H, 1), lambda b: (0, 0)),             # bias (resident)
        ],
        out_specs=pl.BlockSpec((None, H, T), lambda b: (b, 0, 0)),
        compiler_params=pltpu.CompilerParams(
            dimension_semantics=("parallel",),   # shard batches across TCs (v7x)
        ),
    )(x, weight, bias2d)


def reference_forward(x, weight, bias):
    # conv1d(x.transpose(1,2)) with kernel_size=1, then relu -> (B, H, T)
    y = jnp.einsum("btc,hc->bht", x, weight) + bias[None, :, None]
    return jnp.maximum(y, 0.0)


if __name__ == "__main__":
    # Small shapes consistent with the module (video-feature front-end):
    # batch=2, T=128 clips, input_size=256, hidden_size=128 — all lane-aligned.
    B, T, Cin, H = 2, 128, 256, 128

    key = jax.random.PRNGKey(0)
    k_x, k_w, k_b = jax.random.split(key, 3)

    x = jax.random.normal(k_x, (B, T, Cin), dtype=jnp.float32)

    # Conv1d default init: U(-stdv, stdv), stdv = 1/sqrt(Cin * kernel_size)
    stdv = 1.0 / math.sqrt(Cin)
    weight = jax.random.uniform(
        k_w, (H, Cin), minval=-stdv, maxval=stdv, dtype=jnp.float32
    )
    bias = jax.random.uniform(
        k_b, (H,), minval=-stdv, maxval=stdv, dtype=jnp.float32
    )

    ref = reference_forward(x, weight, bias)

    # f32 MXU path: exact parity with the reference.
    out = feat_avg_pool_forward(x, weight, bias)
    jax.block_until_ready(out)
    assert out.shape == (B, H, T)
    assert jnp.allclose(out, ref, atol=1e-5, rtol=1e-5), "f32 mismatch vs reference"

    # bf16-operand MXU path (v6e/v7x throughput path; f32 accumulate + f32 VPU).
    out_bf16 = feat_avg_pool_forward(x, weight, bias, mxu_dtype=jnp.bfloat16)
    jax.block_until_ready(out_bf16)
    assert jnp.allclose(out_bf16, ref, atol=5e-2, rtol=5e-2), "bf16 mismatch vs reference"

    print("KERNEL_OK")
</pallas_src>

<mosaic_0001>
module attributes {stable_mosaic.version = 11 : i64} {
  func.func @kernel(%arg0: i32, %arg1: memref<1x128x256xf32, #tpu.memory_space<vmem>>, %arg2: memref<128x256xf32, #tpu.memory_space<vmem>>, %arg3: memref<128x1xf32, #tpu.memory_space<vmem>>, %arg4: memref<1x128x128xf32, #tpu.memory_space<vmem>>) attributes {dimension_semantics = [#tpu.dimension_semantics<parallel>], iteration_bounds = array<i64: 2>, scalar_prefetch = 0 : i64, scratch_operands = 0 : i64, tpu.core_type = #tpu.core_type<tc>, window_params = [{transform_indices = @transform_0, window_bounds = array<i64: 1, 128, 256>}, {pipeline_mode = #tpu.pipeline_mode<synchronous>, transform_indices = @transform_1, window_bounds = array<i64: 128, 256>}, {pipeline_mode = #tpu.pipeline_mode<synchronous>, transform_indices = @transform_2, window_bounds = array<i64: 128, 1>}, {transform_indices = @transform_3, window_bounds = array<i64: 1, 128, 128>}]} {
    %c0 = arith.constant 0 : index
    %c0_0 = arith.constant 0 : index
    %c0_1 = arith.constant 0 : index
    %0 = vector.load %arg1[%c0, %c0_0, %c0_1] : memref<1x128x256xf32, #tpu.memory_space<vmem>>, vector<1x128x256xf32>
    %1 = vector.shape_cast %0 : vector<1x128x256xf32> to vector<128x256xf32>
    %c0_2 = arith.constant 0 : index
    %c0_3 = arith.constant 0 : index
    %2 = vector.load %arg2[%c0_2, %c0_3] : memref<128x256xf32, #tpu.memory_space<vmem>>, vector<128x256xf32>
    %cst = arith.constant dense<0.000000e+00> : vector<128x128xf32>
    %3 = tpu.matmul %2, %1, %cst {dimension_numbers = #tpu.dot_dimension_numbers<[1], [1], [0], [0], [0, 0, 1, 0], [], []>} : vector<128x256xf32>, vector<128x256xf32>, vector<128x128xf32> -> vector<128x128xf32>
    %c0_4 = arith.constant 0 : index
    %c0_5 = arith.constant 0 : index
    %4 = vector.load %arg3[%c0_4, %c0_5] : memref<128x1xf32, #tpu.memory_space<vmem>>, vector<128x1xf32>
    %5 = vector.broadcast %4 : vector<128x1xf32> to vector<128x128xf32>
    %6 = arith.addf %3, %5 : vector<128x128xf32>
    %cst_6 = arith.constant 0.000000e+00 : f32
    %7 = vector.broadcast %cst_6 : f32 to vector<128x128xf32>
    %8 = arith.maximumf %6, %7 : vector<128x128xf32>
    %c0_7 = arith.constant 0 : index
    %c0_8 = arith.constant 0 : index
    %c0_9 = arith.constant 0 : index
    %9 = vector.load %arg4[%c0_7, %c0_8, %c0_9] : memref<1x128x128xf32, #tpu.memory_space<vmem>>, vector<1x128x128xf32>
    %10 = vector.shape_cast %9 : vector<1x128x128xf32> to vector<128x128xf32>
    %11 = vector.shape_cast %8 : vector<128x128xf32> to vector<1x128x128xf32>
    tpu.vector_store %arg4[%c0_7, %c0_8, %c0_9], %11 {strides = array<i32>} : memref<1x128x128xf32, #tpu.memory_space<vmem>>, vector<1x128x128xf32>,
    return
  }
  func.func @transform_0(%arg0: i32) -> (i32, i32, i32) {
    %c0_i32 = arith.constant 0 : i32
    %c0_i32_0 = arith.constant 0 : i32
    %c0_i32_1 = arith.constant 0 : i32
    return %arg0, %c0_i32, %c0_i32_0 : i32, i32, i32
  }
  func.func @transform_1(%arg0: i32) -> (i32, i32) {
    %c0_i32 = arith.constant 0 : i32
    %c0_i32_0 = arith.constant 0 : i32
    %c0_i32_1 = arith.constant 0 : i32
    return %c0_i32, %c0_i32_0 : i32, i32
  }
  func.func @transform_2(%arg0: i32) -> (i32, i32) {
    %c0_i32 = arith.constant 0 : i32
    %c0_i32_0 = arith.constant 0 : i32
    %c0_i32_1 = arith.constant 0 : i32
    return %c0_i32, %c0_i32_0 : i32, i32
  }
  func.func @transform_3(%arg0: i32) -> (i32, i32, i32) {
    %c0_i32 = arith.constant 0 : i32
    %c0_i32_0 = arith.constant 0 : i32
    %c0_i32_1 = arith.constant 0 : i32
    return %arg0, %c0_i32, %c0_i32_0 : i32, i32, i32
  }
}

</mosaic_0001>

<llo_original>
// kernel: tpu_custom_call.1
$region0: #{tpu_custom_call.1}
  #allocation0 [shape = 'u32[]', space=smem, size = 0x4, offset = 0x4, fixed_abs, tag = 'smem constant byte address 0x4 - core index']
  #allocation1 [shape = 'u32[144,128]{1,0:T(1,128)}', space=vmem, size = 0x12000, scoped, tag = 'internal scratch']
  %s0 = inlined_call_operand.hbm [shape: f32[2,128,256], index: 0, kind: input, shape index: {}]
  %s1 = inlined_call_operand.hbm [shape: f32[128,256], index: 1, kind: input, shape index: {}]
  %s2 = inlined_call_operand.vmem [shape: f32[128,1], index: 2, kind: input, shape index: {}]
  %s3 = inlined_call_operand.hbm [shape: f32[2,128,128], index: 3, kind: output, shape index: {}]
  %s4 = sld [smem:[#allocation0]]
  $region53: #{tpu_custom_call.1} parent=0
    _
  %s6 = ssub.s32 1, %s4
  %s7 = scalar_select 0, %s6, %s4
  $region1: #{tpu_custom_call.1} parent=0
    #allocation2 [shape = 'u8[262144]{0}', space=vmem, size = 0x40000, scoped, tag = 'input window, operand 0']
    #allocation3 [shape = 's32[2]{0}', space=sflag, size = 0x8, scoped, tag = 'scoped memory for tpu_custom_call.1']
    #allocation4 [shape = 's32[2]{0}', space=sflag, size = 0x8, scoped, tag = 'scoped memory for tpu_custom_call.1']
    #allocation5 [shape = 'u8[131072]{0}', space=vmem, size = 0x20000, scoped, tag = 'input window, operand 1, single buffered']
    #allocation6 [shape = 's32[1]{0}', space=sflag, size = 0x4, scoped, tag = 'scoped memory for tpu_custom_call.1']
    #allocation7 [shape = 'u8[131072]{0}', space=vmem, size = 0x20000, scoped, tag = 'output window, operand 0']
    %8 = vsyncpa [#allocation3], 0
    %s9 = scalar_lea.sflag [#allocation3], 1
    %10 = vsyncpa %s9, 0
    %11 = vsyncpa [#allocation6], 0
    %12 = vsyncpa [#allocation4], 0
    %s13 = scalar_lea.sflag [#allocation4], 1
    %14 = vsyncpa %s13, 0
    loop: start=0, step=1, limit=4
    $region2: #{tpu_custom_call.1} parent=1 // loop_pre_header
      _
    $region3: #{tpu_custom_call.1} parent=1 // loop_header
      %s16 = sphi 0, %s20
      %p17 = scmp.ge.s32.totalorder %s16, 4
      %s26 = sphi 0, %s28
      %s29 = sphi 0, %s26
      %s30 = sphi 0, %s29
      %s46 = sphi 0, %s30
      %s50 = sphi 0, %s50
      %s52 = sphi 0, %s50
      %s53 = sphi 0, %s52
      %s67 = sphi 0, %s53
      %s71 = sphi 0, %s71
      %s73 = sphi 0, %s71
      %s74 = sphi 0, %s73
      %s88 = sphi 0, %s74
      %s94 = sphi 0, %s96
      %s97 = sphi 0, %s94
      %s98 = sphi 0, %s97
      %s114 = sphi 0, %s98
    $region4: #{tpu_custom_call.1} parent=1 // loop_header_branch
      %19 = sbr.rel (%p17) target = $region8
    $region5: #{tpu_custom_call.1} parent=1 // loop_body
      %s21 = ssub.s32 %s16, 1
      %s22 = ssub.s32 %s16, 2
      %s23 = sadd.s32 %s16, 1
      %s24 = ssub.s32 %s16, %s23
      %p25 = scmp.eq.s32.totalorder %s24, 0
      %s27 = sadd.s32 %s26, 1
      %s28 = scalar_select %p25, %s26, %s27
      %p31 = pneg %p25
      %p32 = scmp.eq.s32.totalorder %s16, 1
      %p33 = por %p31, %p32
      %p34 = scmp.ne.s32.totalorder %s26, %s29
      %p35 = scmp.eq.s32.totalorder %s16, 0
      %p36 = por %p34, %p35
      %p37 = scmp.ne.s32.totalorder %s26, %s29
      %p38 = scmp.eq.s32.totalorder %s21, 1
      %p39 = por %p37, %p38
      %p40 = scmp.ne.s32.totalorder %s29, %s30
      %p41 = scmp.eq.s32.totalorder %s21, 0
      %p42 = por %p40, %p41
      %p43 = scmp.ne.s32.totalorder %s29, %s30
      %p44 = scmp.eq.s32.totalorder %s22, 1
      %p45 = por %p43, %p44
      %p47 = scmp.ne.s32.totalorder %s30, %s46
      %p48 = scmp.eq.s32.totalorder %s22, 0
      %p49 = por %p47, %p48
      %s51 = sadd.s32 %s50, 1
      %p54 = scmp.eq.s32.totalorder %s16, 1
      %p55 = scmp.ne.s32.totalorder %s50, %s52
      %p56 = scmp.eq.s32.totalorder %s16, 0
      %p57 = por %p55, %p56
      %p58 = scmp.ne.s32.totalorder %s50, %s52
      %p59 = scmp.eq.s32.totalorder %s21, 1
      %p60 = por %p58, %p59
      %p61 = scmp.ne.s32.totalorder %s52, %s53
      %p62 = scmp.eq.s32.totalorder %s21, 0
      %p63 = por %p61, %p62
      %p64 = scmp.ne.s32.totalorder %s52, %s53
      %p65 = scmp.eq.s32.totalorder %s22, 1
      %p66 = por %p64, %p65
      %p68 = scmp.ne.s32.totalorder %s53, %s67
      %p69 = scmp.eq.s32.totalorder %s22, 0
      %p70 = por %p68, %p69
      %s72 = sadd.s32 %s71, 1
      %p75 = scmp.eq.s32.totalorder %s16, 1
      %p76 = scmp.ne.s32.totalorder %s71, %s73
      %p77 = scmp.eq.s32.totalorder %s16, 0
      %p78 = por %p76, %p77
      %p79 = scmp.ne.s32.totalorder %s71, %s73
      %p80 = scmp.eq.s32.totalorder %s21, 1
      %p81 = por %p79, %p80
      %p82 = scmp.ne.s32.totalorder %s73, %s74
      %p83 = scmp.eq.s32.totalorder %s21, 0
      %p84 = por %p82, %p83
      %p85 = scmp.ne.s32.totalorder %s73, %s74
      %p86 = scmp.eq.s32.totalorder %s22, 1
      %p87 = por %p85, %p86
      %p89 = scmp.ne.s32.totalorder %s74, %s88
      %p90 = scmp.eq.s32.totalorder %s22, 0
      %p91 = por %p89, %p90
      %s92 = ssub.s32 %s16, %s23
      %p93 = scmp.eq.s32.totalorder %s92, 0
      %s95 = sadd.s32 %s94, 1
      %s96 = scalar_select %p93, %s94, %s95
      %p99 = pneg %p93
      %p100 = scmp.eq.s32.totalorder %s16, 1
      %p101 = por %p99, %p100
      %p102 = scmp.ne.s32.totalorder %s94, %s97
      %p103 = scmp.eq.s32.totalorder %s16, 0
      %p104 = por %p102, %p103
      %p105 = scmp.ne.s32.totalorder %s94, %s97
      %p106 = scmp.eq.s32.totalorder %s21, 1
      %p107 = por %p105, %p106
      %p108 = scmp.ne.s32.totalorder %s97, %s98
      %p109 = scmp.eq.s32.totalorder %s21, 0
      %p110 = por %p108, %p109
      %p111 = scmp.ne.s32.totalorder %s97, %s98
      %p112 = scmp.eq.s32.totalorder %s22, 1
      %p113 = por %p111, %p112
      %p115 = scmp.ne.s32.totalorder %s98, %s114
      %p116 = scmp.eq.s32.totalorder %s22, 0
      %p117 = por %p115, %p116
      %p118 = scmp.le.s32.totalorder 1, %s16
      %p119 = scmp.lt.s32.totalorder %s16, 3
      %p120 = pnand %p118, %p119
      %p121 = pneg %p120
      // Predicated region
      $region9: #{tpu_custom_call.1} parent=5 // pred_check
        _
      $region10: #{tpu_custom_call.1} parent=5 // pred_check_branch
        %123 = sbr.rel (%p120) target = $region12
      $region11: #{tpu_custom_call.1} parent=5 // pred_region
        %s124 = ssub.s32 %s16, 1
        // Predicated region
        $region13: #{tpu_custom_call.1} parent=11 // pred_check
          %p125 = pneg %p63
        $region14: #{tpu_custom_call.1} parent=11 // pred_check_branch
          %127 = sbr.rel (%p125) target = $region16
        $region15: #{tpu_custom_call.1} parent=11 // pred_region
          %s129 = ssub.s32 4096, 4096
          %130 = vsyncadd [#allocation6], %s129
          %s131 = sshll.u32 [#allocation5], 4
          %s132 = int_to_ptr.vmem [resolvable:$true] %s131
          %137 = dma.hbm_to_vmem [thread:$0]  %s1, 4096, %s132, [#allocation6], 256, 256, 16
        $region16: #{tpu_custom_call.1} parent=11 // pred_fallthru
          _
        // Predicated region
        $region17: #{tpu_custom_call.1} parent=11 // pred_check
          %p138 = pneg %p84
        $region18: #{tpu_custom_call.1} parent=11 // pred_check_branch
          %140 = sbr.rel (%p138) target = $region20
        $region19: #{tpu_custom_call.1} parent=11 // pred_region
          _
        $region20: #{tpu_custom_call.1} parent=11 // pred_fallthru
          _
      $region12: #{tpu_custom_call.1} parent=5 // pred_fallthru
        _
      %p141 = scmp.lt.s32.totalorder %s16, 2
      // Predicated region
      $region21: #{tpu_custom_call.1} parent=5 // pred_check
        %p142 = pneg %p141
      $region22: #{tpu_custom_call.1} parent=5 // pred_check_branch
        %144 = sbr.rel (%p142) target = $region24
      $region23: #{tpu_custom_call.1} parent=5 // pred_region
        // Predicated region
        $region25: #{tpu_custom_call.1} parent=23 // pred_check
          %p145 = pneg %p36
        $region26: #{tpu_custom_call.1} parent=23 // pred_check_branch
          %147 = sbr.rel (%p145) target = $region28
        $region27: #{tpu_custom_call.1} parent=23 // pred_region
          %s148 = sand.u32 %s26, 1
          %s149 = scalar_lea.sflag [#allocation3], %s148
          %s150 = sand.u32 %s26, 1
          %s151 = smul.addr %s150, 256
          %s152 = scalar_lea.vmem [#allocation2], %s151
          %s154 = ssub.s32 4096, 4096
          %155 = vsyncadd %s149, %s154
          %s156 = smul.addr %s16, 32
          %s157 = smul.addr %s156, 128
          %s158 = scalar_lea.hbm %s0, %s157
          %s159 = sshll.u32 %s152, 4
          %s160 = int_to_ptr.vmem [resolvable:$true] %s159
          %165 = dma.hbm_to_vmem [thread:$0]  %s158, 4096, %s160, %s149, 256, 256, 16
        $region28: #{tpu_custom_call.1} parent=23 // pred_fallthru
          _
      $region24: #{tpu_custom_call.1} parent=5 // pred_fallthru
        _
      %p166 = scmp.le.s32.totalorder 1, %s16
      %p167 = scmp.lt.s32.totalorder %s16, 3
      %p168 = pnand %p166, %p167
      %p169 = pneg %p168
      // Predicated region
      $region29: #{tpu_custom_call.1} parent=5 // pred_check
        _
      $region30: #{tpu_custom_call.1} parent=5 // pred_check_branch
        %171 = sbr.rel (%p168) target = $region32
      $region31: #{tpu_custom_call.1} parent=5 // pred_region
        %s172 = ssub.s32 %s16, 1
        %s173 = sand.u32 %s29, 1
        %s174 = scalar_lea.sflag [#allocation3], %s173
        %s175 = sand.u32 %s29, 1
        %s176 = smul.addr %s175, 256
        %s177 = scalar_lea.vmem [#allocation2], %s176
        // Predicated region
        $region33: #{tpu_custom_call.1} parent=31 // pred_check
          %p178 = pneg %p42
        $region34: #{tpu_custom_call.1} parent=31 // pred_check_branch
          %180 = sbr.rel (%p178) target = $region36
        $region35: #{tpu_custom_call.1} parent=31 // pred_region
          %181 = dma.done %s174, 4096
        $region36: #{tpu_custom_call.1} parent=31 // pred_fallthru
          _
        // Predicated region
        $region37: #{tpu_custom_call.1} parent=31 // pred_check
          %p182 = pneg %p63
        $region38: #{tpu_custom_call.1} parent=31 // pred_check_branch
          %184 = sbr.rel (%p182) target = $region40
        $region39: #{tpu_custom_call.1} parent=31 // pred_region
          %185 = dma.done [#allocation6], 4096
        $region40: #{tpu_custom_call.1} parent=31 // pred_fallthru
          _
        %s186 = sand.u32 %s29, 1
        %s187 = scalar_lea.sflag [#allocation3], %s186
        %s188 = sand.u32 %s29, 1
        %s189 = smul.addr %s188, 256
        %s190 = scalar_lea.vmem [#allocation2], %s189
        %p191 = pneg %p42
        %p192 = pneg %p39
        %p193 = pneg %p63
        %p194 = pneg %p60
        %p195 = pneg %p84
        %p196 = pneg %p81
        %p197 = pneg %p110
        %p198 = pneg %p107
        %s199 = sand.u32 %s97, 1
        %s200 = scalar_lea.sflag [#allocation4], %s199
        %s201 = sand.u32 %s97, 1
        %s202 = smul.addr %s201, 128
        %s203 = scalar_lea.vmem [#allocation7], %s202
        %v204 = vld [vmem:[%s177] sm:$0xff]
        %v205 = vld [vmem:[%s177 + $0x8] sm:$0xff]
        %v206 = vld [vmem:[%s177 + $0x10] sm:$0xff]
        %v207 = vld [vmem:[%s177 + $0x18] sm:$0xff]
        %v208 = vld [vmem:[%s177 + $0x20] sm:$0xff]
        %v209 = vld [vmem:[%s177 + $0x28] sm:$0xff]
        %v210 = vld [vmem:[%s177 + $0x30] sm:$0xff]
        %v211 = vld [vmem:[%s177 + $0x38] sm:$0xff]
        %v212 = vld [vmem:[%s177 + $0x40] sm:$0xff]
        %v213 = vld [vmem:[%s177 + $0x48] sm:$0xff]
        %v214 = vld [vmem:[%s177 + $0x50] sm:$0xff]
        %v215 = vld [vmem:[%s177 + $0x58] sm:$0xff]
        %v216 = vld [vmem:[%s177 + $0x60] sm:$0xff]
        %v217 = vld [vmem:[%s177 + $0x68] sm:$0xff]
        %v218 = vld [vmem:[%s177 + $0x70] sm:$0xff]
        %v219 = vld [vmem:[%s177 + $0x78] sm:$0xff]
        %v220 = vld [vmem:[%s177 + $0x80] sm:$0xff]
        %v221 = vld [vmem:[%s177 + $0x88] sm:$0xff]
        %v222 = vld [vmem:[%s177 + $0x90] sm:$0xff]
        %v223 = vld [vmem:[%s177 + $0x98] sm:$0xff]
        %v224 = vld [vmem:[%s177 + $0xa0] sm:$0xff]
        %v225 = vld [vmem:[%s177 + $0xa8] sm:$0xff]
        %v226 = vld [vmem:[%s177 + $0xb0] sm:$0xff]
        %v227 = vld [vmem:[%s177 + $0xb8] sm:$0xff]
        %v228 = vld [vmem:[%s177 + $0xc0] sm:$0xff]
        %v229 = vld [vmem:[%s177 + $0xc8] sm:$0xff]
        %v230 = vld [vmem:[%s177 + $0xd0] sm:$0xff]
        %v231 = vld [vmem:[%s177 + $0xd8] sm:$0xff]
        %v232 = vld [vmem:[%s177 + $0xe0] sm:$0xff]
        %v233 = vld [vmem:[%s177 + $0xe8] sm:$0xff]
        %v234 = vld [vmem:[%s177 + $0xf0] sm:$0xff]
        %v235 = vld [vmem:[%s177 + $0xf8] sm:$0xff]
        %v236 = vld [vmem:[#allocation5] sm:$0xff]
        %v237 = vld [vmem:[#allocation5 + $0x8] sm:$0xff]
        %v238 = vld [vmem:[#allocation5 + $0x10] sm:$0xff]
        %v239 = vld [vmem:[#allocation5 + $0x18] sm:$0xff]
        %v240 = vld [vmem:[#allocation5 + $0x20] sm:$0xff]
        %v241 = vld [vmem:[#allocation5 + $0x28] sm:$0xff]
        %v242 = vld [vmem:[#allocation5 + $0x30] sm:$0xff]
        %v243 = vld [vmem:[#allocation5 + $0x38] sm:$0xff]
        %v244 = vld [vmem:[#allocation5 + $0x40] sm:$0xff]
        %v245 = vld [vmem:[#allocation5 + $0x48] sm:$0xff]
        %v246 = vld [vmem:[#allocation5 + $0x50] sm:$0xff]
        %v247 = vld [vmem:[#allocation5 + $0x58] sm:$0xff]
        %v248 = vld [vmem:[#allocation5 + $0x60] sm:$0xff]
        %v249 = vld [vmem:[#allocation5 + $0x68] sm:$0xff]
        %v250 = vld [vmem:[#allocation5 + $0x70] sm:$0xff]
        %v251 = vld [vmem:[#allocation5 + $0x78] sm:$0xff]
        %v252 = vld [vmem:[#allocation5 + $0x80] sm:$0xff]
        %v253 = vld [vmem:[#allocation5 + $0x88] sm:$0xff]
        %v254 = vld [vmem:[#allocation5 + $0x90] sm:$0xff]
        %v255 = vld [vmem:[#allocation5 + $0x98] sm:$0xff]
        %v256 = vld [vmem:[#allocation5 + $0xa0] sm:$0xff]
        %v257 = vld [vmem:[#allocation5 + $0xa8] sm:$0xff]
        %v258 = vld [vmem:[#allocation5 + $0xb0] sm:$0xff]
        %v259 = vld [vmem:[#allocation5 + $0xb8] sm:$0xff]
        %v260 = vld [vmem:[#allocation5 + $0xc0] sm:$0xff]
        %v261 = vld [vmem:[#allocation5 + $0xc8] sm:$0xff]
        %v262 = vld [vmem:[#allocation5 + $0xd0] sm:$0xff]
        %v263 = vld [vmem:[#allocation5 + $0xd8] sm:$0xff]
        %v264 = vld [vmem:[#allocation5 + $0xe0] sm:$0xff]
        %v265 = vld [vmem:[#allocation5 + $0xe8] sm:$0xff]
        %v266 = vld [vmem:[#allocation5 + $0xf0] sm:$0xff]
        %v267 = vld [vmem:[#allocation5 + $0xf8] sm:$0xff]
        %v268 = vld [vmem:[%s2] sm:$0xff]
        %v269 = vld [vmem:[%s2 + $0x8] sm:$0xff]
        %v270 = vld [vmem:[%s2 + $0x10] sm:$0xff]
        %v271 = vld [vmem:[%s2 + $0x18] sm:$0xff]
        %v272 = vld [vmem:[%s2 + $0x20] sm:$0xff]
        %v273 = vld [vmem:[%s2 + $0x28] sm:$0xff]
        %v274 = vld [vmem:[%s2 + $0x30] sm:$0xff]
        %v275 = vld [vmem:[%s2 + $0x38] sm:$0xff]
        %v276 = vld [vmem:[%s2 + $0x40] sm:$0xff]
        %v277 = vld [vmem:[%s2 + $0x48] sm:$0xff]
        %v278 = vld [vmem:[%s2 + $0x50] sm:$0xff]
        %v279 = vld [vmem:[%s2 + $0x58] sm:$0xff]
        %v280 = vld [vmem:[%s2 + $0x60] sm:$0xff]
        %v281 = vld [vmem:[%s2 + $0x68] sm:$0xff]
        %v282 = vld [vmem:[%s2 + $0x70] sm:$0xff]
        %v283 = vld [vmem:[%s2 + $0x78] sm:$0xff]
        %285 = vset.pattern.permute.xlu0 0
        %286 = vperm.xlu0 %285, %v268
        %v287 = vpop.permute.xlu0 %286
        %290 = vset.pattern.permute.xlu0 0
        %291 = vperm.xlu0 %290, %v269
        %v292 = vpop.permute.xlu0 %291
        %295 = vset.pattern.permute.xlu0 0
        %296 = vperm.xlu0 %295, %v270
        %v297 = vpop.permute.xlu0 %296
        %300 = vset.pattern.permute.xlu0 0
        %301 = vperm.xlu0 %300, %v271
        %v302 = vpop.permute.xlu0 %301
        %305 = vset.pattern.permute.xlu0 0
        %306 = vperm.xlu0 %305, %v272
        %v307 = vpop.permute.xlu0 %306
        %310 = vset.pattern.permute.xlu0 0
        %311 = vperm.xlu0 %310, %v273
        %v312 = vpop.permute.xlu0 %311
        %315 = vset.pattern.permute.xlu0 0
        %316 = vperm.xlu0 %315, %v274
        %v317 = vpop.permute.xlu0 %316
        %320 = vset.pattern.permute.xlu0 0
        %321 = vperm.xlu0 %320, %v275
        %v322 = vpop.permute.xlu0 %321
        %325 = vset.pattern.permute.xlu0 0
        %326 = vperm.xlu0 %325, %v276
        %v327 = vpop.permute.xlu0 %326
        %330 = vset.pattern.permute.xlu0 0
        %331 = vperm.xlu0 %330, %v277
        %v332 = vpop.permute.xlu0 %331
        %335 = vset.pattern.permute.xlu0 0
        %336 = vperm.xlu0 %335, %v278
        %v337 = vpop.permute.xlu0 %336
        %340 = vset.pattern.permute.xlu0 0
        %341 = vperm.xlu0 %340, %v279
        %v342 = vpop.permute.xlu0 %341
        %345 = vset.pattern.permute.xlu0 0
        %346 = vperm.xlu0 %345, %v280
        %v347 = vpop.permute.xlu0 %346
        %350 = vset.pattern.permute.xlu0 0
        %351 = vperm.xlu0 %350, %v281
        %v352 = vpop.permute.xlu0 %351
        %355 = vset.pattern.permute.xlu0 0
        %356 = vperm.xlu0 %355, %v282
        %v357 = vpop.permute.xlu0 %356
        %360 = vset.pattern.permute.xlu0 0
        %361 = vperm.xlu0 %360, %v283
        %v362 = vpop.permute.xlu0 %361
        %364 = vmatprep.subr.mxu0 %v205
        %365 = vmatpush1.xpose.msra.mxu0 %v204
        %366 = vmatprep.subr.mxu0 %v207
        %367 = vmatpush1.xpose.msra.mxu0 %v206
        %368 = vmatprep.subr.mxu0 %v209
        %369 = vmatpush1.xpose.msra.mxu0 %v208
        %370 = vmatprep.subr.mxu0 %v211
        %371 = vmatpush1.xpose.msra.mxu0 %v210
        %372 = vmatprep.subr.mxu0 %v213
        %373 = vmatpush1.xpose.msra.mxu0 %v212
        %374 = vmatprep.subr.mxu0 %v215
        %375 = vmatpush1.xpose.msra.mxu0 %v214
        %376 = vmatprep.subr.mxu0 %v217
        %377 = vmatpush1.xpose.msra.mxu0 %v216
        %378 = vmatprep.subr.mxu0 %v219
        %379 = vmatpush1.xpose.msra.mxu0 %v218
        %380 = vmatprep.subr.mxu0 %v221
        %381 = vmatpush1.xpose.msra.mxu0 %v220
        %382 = vmatprep.subr.mxu0 %v223
        %383 = vmatpush1.xpose.msra.mxu0 %v222
        %384 = vmatprep.subr.mxu0 %v225
        %385 = vmatpush1.xpose.msra.mxu0 %v224
        %386 = vmatprep.subr.mxu0 %v227
        %387 = vmatpush1.xpose.msra.mxu0 %v226
        %388 = vmatprep.subr.mxu0 %v229
        %389 = vmatpush1.xpose.msra.mxu0 %v228
        %390 = vmatprep.subr.mxu0 %v231
        %391 = vmatpush1.xpose.msra.mxu0 %v230
        %392 = vmatprep.subr.mxu0 %v233
        %393 = vmatpush1.xpose.msra.mxu0 %v232
        %394 = vmatprep.subr.mxu0 %v235
        %395 = vmatpush1.xpose.msra.mxu0 %v234
        %396 = vmatprep.subr.mxu0 0.0
        %397 = vmatpush1.xpose.msra.mxu0 0.0
        %398 = vmatprep.subr.mxu0 0.0
        %399 = vmatpush1.xpose.msra.mxu0 0.0
        %400 = vmatprep.subr.mxu0 0.0
        %401 = vmatpush1.xpose.msra.mxu0 0.0
        %402 = vmatprep.subr.mxu0 0.0
        %403 = vmatpush1.xpose.msra.mxu0 0.0
        %404 = vmatprep.subr.mxu0 0.0
        %405 = vmatpush1.xpose.msra.mxu0 0.0
        %406 = vmatprep.subr.mxu0 0.0
        %407 = vmatpush1.xpose.msra.mxu0 0.0
        %408 = vmatprep.subr.mxu0 0.0
        %409 = vmatpush1.xpose.msra.mxu0 0.0
        %410 = vmatprep.subr.mxu0 0.0
        %411 = vmatpush1.xpose.msra.mxu0 0.0
        %412 = vmatprep.subr.mxu0 0.0
        %413 = vmatpush1.xpose.msra.mxu0 0.0
        %414 = vmatprep.subr.mxu0 0.0
        %415 = vmatpush1.xpose.msra.mxu0 0.0
        %416 = vmatprep.subr.mxu0 0.0
        %417 = vmatpush1.xpose.msra.mxu0 0.0
        %418 = vmatprep.subr.mxu0 0.0
        %419 = vmatpush1.xpose.msra.mxu0 0.0
        %420 = vmatprep.subr.mxu0 0.0
        %421 = vmatpush1.xpose.msra.mxu0 0.0
        %422 = vmatprep.subr.mxu0 0.0
        %423 = vmatpush1.xpose.msra.mxu0 0.0
        %424 = vmatprep.subr.mxu0 0.0
        %425 = vmatpush1.xpose.msra.mxu0 0.0
        %426 = vmatprep.subr.mxu0 0.0
        %427 = vmatpush1.xpose.msra.mxu0 0.0
        %428 = vmatprep.mubr.f32.mxu0 %v237
        %429 = vmatmul.mubr.f32.gmra.mrb[0].mxu0 %v236
        %v430 = vpop.f32.mrb[0].mxu0
        %v431 = vadd.f32 %v287, %v430
        %v432 = vpop.f32.mrb[0].mxu0
        %433 = vmatprep.mubr.f32.mxu0 %v239
        %434 = vmatmul.mubr.f32.gmra.mrb[0].mxu0 %v238
        %v435 = vpop.f32.mrb[0].mxu0
        %v436 = vadd.f32 %v292, %v435
        %v437 = vpop.f32.mrb[0].mxu0
        %438 = vmatprep.mubr.f32.mxu0 %v241
        %439 = vmatmul.mubr.f32.gmra.mrb[0].mxu0 %v240
        %v440 = vpop.f32.mrb[0].mxu0
        %v441 = vadd.f32 %v297, %v440
        %v442 = vpop.f32.mrb[0].mxu0
        %443 = vmatprep.mubr.f32.mxu0 %v243
        %444 = vmatmul.mubr.f32.gmra.mrb[0].mxu0 %v242
        %v445 = vpop.f32.mrb[0].mxu0
        %v446 = vadd.f32 %v302, %v445
        %v447 = vpop.f32.mrb[0].mxu0
        %448 = vmatprep.mubr.f32.mxu0 %v245
        %449 = vmatmul.mubr.f32.gmra.mrb[0].mxu0 %v244
        %v450 = vpop.f32.mrb[0].mxu0
        %v451 = vadd.f32 %v307, %v450
        %v452 = vpop.f32.mrb[0].mxu0
        %453 = vmatprep.mubr.f32.mxu0 %v247
        %454 = vmatmul.mubr.f32.gmra.mrb[0].mxu0 %v246
        %v455 = vpop.f32.mrb[0].mxu0
        %v456 = vadd.f32 %v312, %v455
        %v457 = vpop.f32.mrb[0].mxu0
        %458 = vmatprep.mubr.f32.mxu0 %v249
        %459 = vmatmul.mubr.f32.gmra.mrb[0].mxu0 %v248
        %v460 = vpop.f32.mrb[0].mxu0
        %v461 = vadd.f32 %v317, %v460
        %v462 = vpop.f32.mrb[0].mxu0
        %463 = vmatprep.mubr.f32.mxu0 %v251
        %464 = vmatmul.mubr.f32.gmra.mrb[0].mxu0 %v250
        %v465 = vpop.f32.mrb[0].mxu0
        %v466 = vadd.f32 %v322, %v465
        %v467 = vpop.f32.mrb[0].mxu0
        %468 = vmatprep.mubr.f32.mxu0 %v253
        %469 = vmatmul.mubr.f32.gmra.mrb[0].mxu0 %v252
        %v470 = vpop.f32.mrb[0].mxu0
        %v471 = vadd.f32 %v327, %v470
        %v472 = vpop.f32.mrb[0].mxu0
        %473 = vmatprep.mubr.f32.mxu0 %v255
        %474 = vmatmul.mubr.f32.gmra.mrb[0].mxu0 %v254
        %v475 = vpop.f32.mrb[0].mxu0
        %v476 = vadd.f32 %v332, %v475
        %v477 = vpop.f32.mrb[0].mxu0
        %478 = vmatprep.mubr.f32.mxu0 %v257
        %479 = vmatmul.mubr.f32.gmra.mrb[0].mxu0 %v256
        %v480 = vpop.f32.mrb[0].mxu0
        %v481 = vadd.f32 %v337, %v480
        %v482 = vpop.f32.mrb[0].mxu0
        %483 = vmatprep.mubr.f32.mxu0 %v259
        %484 = vmatmul.mubr.f32.gmra.mrb[0].mxu0 %v258
        %v485 = vpop.f32.mrb[0].mxu0
        %v486 = vadd.f32 %v342, %v485
        %v487 = vpop.f32.mrb[0].mxu0
        %488 = vmatprep.mubr.f32.mxu0 %v261
        %489 = vmatmul.mubr.f32.gmra.mrb[0].mxu0 %v260
        %v490 = vpop.f32.mrb[0].mxu0
        %v491 = vadd.f32 %v347, %v490
        %v492 = vpop.f32.mrb[0].mxu0
        %493 = vmatprep.mubr.f32.mxu0 %v263
        %494 = vmatmul.mubr.f32.gmra.mrb[0].mxu0 %v262
        %v495 = vpop.f32.mrb[0].mxu0
        %v496 = vadd.f32 %v352, %v495
        %v497 = vpop.f32.mrb[0].mxu0
        %498 = vmatprep.mubr.f32.mxu0 %v265
        %499 = vmatmul.mubr.f32.gmra.mrb[0].mxu0 %v264
        %v500 = vpop.f32.mrb[0].mxu0
        %v501 = vadd.f32 %v357, %v500
        %v502 = vpop.f32.mrb[0].mxu0
        %503 = vmatprep.mubr.f32.mxu0 %v267
        %504 = vmatmul.mubr.f32.gmra.mrb[0].mxu0 %v266
        %v505 = vpop.f32.mrb[0].mxu0
        %v506 = vadd.f32 %v362, %v505
        %v507 = vpop.f32.mrb[0].mxu0
        %508 = vdwg.mxu0
        %v509 = vmax.f32 %v431, 0.0
        %v510 = vmax.f32 %v436, 0.0
        %v511 = vmax.f32 %v441, 0.0
        %v512 = vmax.f32 %v446, 0.0
        %v513 = vmax.f32 %v451, 0.0
        %v514 = vmax.f32 %v456, 0.0
        %v515 = vmax.f32 %v461, 0.0
        %v516 = vmax.f32 %v466, 0.0
        %v517 = vmax.f32 %v471, 0.0
        %v518 = vmax.f32 %v476, 0.0
        %v519 = vmax.f32 %v481, 0.0
        %v520 = vmax.f32 %v486, 0.0
        %v521 = vmax.f32 %v491, 0.0
        %v522 = vmax.f32 %v496, 0.0
        %v523 = vmax.f32 %v501, 0.0
        %v524 = vmax.f32 %v506, 0.0
        %525 = vst [vmem:[%s203] sm:$0xff] %v509
        %526 = vst [vmem:[%s203 + $0x8] sm:$0xff] %v510
        %527 = vst [vmem:[%s203 + $0x10] sm:$0xff] %v511
        %528 = vst [vmem:[%s203 + $0x18] sm:$0xff] %v512
        %529 = vst [vmem:[%s203 + $0x20] sm:$0xff] %v513
        %530 = vst [vmem:[%s203 + $0x28] sm:$0xff] %v514
        %531 = vst [vmem:[%s203 + $0x30] sm:$0xff] %v515
        %532 = vst [vmem:[%s203 + $0x38] sm:$0xff] %v516
        %533 = vst [vmem:[%s203 + $0x40] sm:$0xff] %v517
        %534 = vst [vmem:[%s203 + $0x48] sm:$0xff] %v518
        %535 = vst [vmem:[%s203 + $0x50] sm:$0xff] %v519
        %536 = vst [vmem:[%s203 + $0x58] sm:$0xff] %v520
        %537 = vst [vmem:[%s203 + $0x60] sm:$0xff] %v521
        %538 = vst [vmem:[%s203 + $0x68] sm:$0xff] %v522
        %539 = vst [vmem:[%s203 + $0x70] sm:$0xff] %v523
        %540 = vst [vmem:[%s203 + $0x78] sm:$0xff] %v524
        %s541 = sand.u32 %s97, 1
        %s542 = scalar_lea.sflag [#allocation4], %s541
        %s543 = sand.u32 %s97, 1
        %s544 = smul.addr %s543, 128
        %s545 = scalar_lea.vmem [#allocation7], %s544
        // Predicated region
        $region41: #{tpu_custom_call.1} parent=31 // pred_check
          %p546 = pneg %p107
        $region42: #{tpu_custom_call.1} parent=31 // pred_check_branch
          %548 = sbr.rel (%p546) target = $region44
        $region43: #{tpu_custom_call.1} parent=31 // pred_region
          %s550 = ssub.s32 2048, 2048
          %551 = vsyncadd %s542, %s550
          %s552 = smul.addr %s21, 16
          %s553 = smul.addr %s552, 128
          %s554 = scalar_lea.hbm %s3, %s553
          %s555 = sshll.u32 %s545, 4
          %s556 = int_to_ptr.vmem [resolvable:$true] %s555
          %561 = dma.vmem_to_hbm [thread:$0]  %s556, 2048, %s554, %s542, 128, 128, 8
        $region44: #{tpu_custom_call.1} parent=31 // pred_fallthru
          _
      $region32: #{tpu_custom_call.1} parent=5 // pred_fallthru
        _
      %p562 = scmp.le.s32.totalorder 2, %s16
      // Predicated region
      $region45: #{tpu_custom_call.1} parent=5 // pred_check
        %p563 = pneg %p562
      $region46: #{tpu_custom_call.1} parent=5 // pred_check_branch
        %565 = sbr.rel (%p563) target = $region48
      $region47: #{tpu_custom_call.1} parent=5 // pred_region
        %s566 = ssub.s32 %s16, 2
        // Predicated region
        $region49: #{tpu_custom_call.1} parent=47 // pred_check
          %p567 = pneg %p113
        $region50: #{tpu_custom_call.1} parent=47 // pred_check_branch
          %569 = sbr.rel (%p567) target = $region52
        $region51: #{tpu_custom_call.1} parent=47 // pred_region
          %s570 = sand.u32 %s98, 1
          %s571 = scalar_lea.sflag [#allocation4], %s570
          %s572 = sand.u32 %s98, 1
          %s573 = smul.addr %s572, 128
          %s574 = scalar_lea.vmem [#allocation7], %s573
          %575 = dma.done %s571, 2048
        $region52: #{tpu_custom_call.1} parent=47 // pred_fallthru
          _
      $region48: #{tpu_custom_call.1} parent=5 // pred_fallthru
        _
    $region6: #{tpu_custom_call.1} parent=1 // loop_footer
      %s20 = sadd.s32 1, %s16
    $region7: #{tpu_custom_call.1} parent=1 // loop_footer_branch
      %15 = sbr.rel target = $region3
    $region8: #{tpu_custom_call.1} parent=1 // loop_exit
      _
    %576 = vsyncpa [#allocation3], 1
    %s577 = scalar_lea.sflag [#allocation3], 1
    %578 = vsyncpa %s577, 1
    %579 = vsyncpa [#allocation6], 1
    %580 = vsyncpa [#allocation4], 1
    %s581 = scalar_lea.sflag [#allocation4], 1
    %582 = vsyncpa %s581, 1

</llo_original>
